<compile_context>
chip_gen: v7x
topology: tpu7x:2x2x1
jax: 0.10.0
libtpu: 0.0.40
codegen_flags: <defaults>
</compile_context>

<pallas_src>
import functools

import jax
import jax.numpy as jnp
from jax.experimental import pallas as pl
from jax.experimental.pallas import tpu as pltpu

LB_POS = 0.9
LB_NEG = 0.005
LB_IGNORE = 255


def _ls_ce_kernel(logits_ref, label_ref, loss_ref, *, lb_pos, lb_neg,
                  lb_ignore, num_classes):
    # logits_ref: (C, T)  classes on sublanes, pixels on lanes (bf16/f32 ok)
    # label_ref:  (1, T)  int32
    # loss_ref:   (1, T)  f32  (lane-dense output -> unmasked stores)
    x = logits_ref[...].astype(jnp.float32)                       # (C, T)
    lbl = label_ref[...]                                          # (1, T)

    # log-softmax pieces over the class (sublane) axis
    m = jnp.max(x, axis=0, keepdims=True)                         # (1, T)
    z = x - m                                                     # (C, T)
    lse = jnp.log(jnp.sum(jnp.exp(z), axis=0, keepdims=True))     # (1, T)
    sum_z = jnp.sum(z, axis=0, keepdims=True)                     # (1, T)

    ignore = lbl == lb_ignore                                     # (1, T)
    lbl_safe = jnp.where(ignore, 0, lbl)                          # (1, T)
    classes = jax.lax.broadcasted_iota(jnp.int32, x.shape, 0)     # (C, T)
    z_at = jnp.sum(jnp.where(classes == lbl_safe, z, 0.0),
                   axis=0, keepdims=True)                         # (1, T)

    # loss = -sum_c smooth_c * logsoftmax_c, algebraically simplified:
    #   = -( lb_neg*(sum_z - C*lse) + (lb_pos-lb_neg)*(z_label - lse) )
    loss = -(lb_neg * (sum_z - float(num_classes) * lse)
             + (lb_pos - lb_neg) * (z_at - lse))                  # (1, T)
    loss_ref[...] = jnp.where(ignore, 0.0, loss)


def _pick_tile_hw(hw, c, itemsize, target_bytes=2 << 20, max_tile=8192):
    """Largest lane tile (multiple of 128) that divides hw and keeps the
    per-step logits block around target_bytes (VMEM-safe on v7x too)."""
    desired = min(max_tile, max(128, target_bytes // max(1, c * itemsize)))
    desired = max(128, (desired // 128) * 128)
    if hw <= desired:
        return hw
    t = desired
    while t >= 128:
        if hw % t == 0:
            return t
        t -= 128
    # no nice divisor: one block spans the whole row (still no padding/transpose)
    return hw


def label_smooth_softmax_ce(logits, label, *, lb_pos=LB_POS, lb_neg=LB_NEG,
                            lb_ignore=LB_IGNORE, reduction="mean",
                            tile_hw=None):
    """logits: (N, C, H, W) float32/bfloat16; label: (N, H, W) int."""
    N, C, H, W = logits.shape
    HW = H * W

    # Free reshapes only: no NCHW->NHWC transpose, no logits padding.
    x3 = logits.reshape(N, C, HW)
    lbl3 = label.reshape(N, 1, HW).astype(jnp.int32)

    if tile_hw is None:
        tile_hw = _pick_tile_hw(HW, C, x3.dtype.itemsize)
    t = tile_hw

    kernel = functools.partial(_ls_ce_kernel, lb_pos=lb_pos, lb_neg=lb_neg,
                               lb_ignore=lb_ignore, num_classes=C)

    per_pix = pl.pallas_call(
        kernel,
        out_shape=jax.ShapeDtypeStruct((N, 1, HW), jnp.float32),
        grid_spec=pltpu.PrefetchScalarGridSpec(
            num_scalar_prefetch=0,
            grid=(N, HW // t),
            in_specs=[
                # batch dim squeezed; classes on sublanes, T_HW pixels on lanes
                pl.BlockSpec((None, C, t), lambda n, j: (n, 0, j)),
                pl.BlockSpec((None, 1, t), lambda n, j: (n, 0, j)),
            ],
            out_specs=pl.BlockSpec((None, 1, t), lambda n, j: (n, 0, j)),
        ),
        compiler_params=pltpu.CompilerParams(
            dimension_semantics=("parallel", "parallel")),
    )(x3, lbl3)

    per_pix = per_pix.reshape(N, HW)
    # Tiny glue: n_valid + final reduction (label re-read is M*4 bytes, negligible
    # next to the logits traffic the kernel already does).
    n_valid = jnp.sum(label != lb_ignore)

    if reduction == "mean":
        return jnp.sum(per_pix) / n_valid.astype(jnp.float32)
    elif reduction == "sum":
        return jnp.sum(per_pix)
    elif reduction == "none":
        return per_pix.reshape(N, H, W)
    else:
        raise ValueError(reduction)


def _reference(logits, label, *, lb_pos=LB_POS, lb_neg=LB_NEG,
               lb_ignore=LB_IGNORE):
    # pure-JAX reference of the PyTorch module (reduction='mean')
    logs = jax.nn.log_softmax(logits.astype(jnp.float32), axis=1)  # (N,C,H,W)
    ignore = label == lb_ignore
    n_valid = jnp.sum(~ignore)
    lbl = jnp.where(ignore, 0, label)
    one_hot = jax.nn.one_hot(lbl, logits.shape[1], axis=1, dtype=jnp.float32)
    smooth = lb_pos * one_hot + lb_neg * (1.0 - one_hot)
    loss = -jnp.sum(logs * smooth, axis=1)                         # (N,H,W)
    loss = jnp.where(ignore, 0.0, loss)
    return jnp.sum(loss) / n_valid.astype(jnp.float32)


if __name__ == "__main__":
    key = jax.random.PRNGKey(0)
    k1, k2, k3 = jax.random.split(key, 3)

    N, C, H, W = 2, 4, 16, 16
    logits = jax.random.normal(k1, (N, C, H, W), dtype=jnp.float32)
    label = jax.random.randint(k2, (N, H, W), 0, C, dtype=jnp.int32)
    # sprinkle some ignore labels
    ignore_mask = jax.random.uniform(k3, (N, H, W)) < 0.1
    label = jnp.where(ignore_mask, LB_IGNORE, label)

    out = label_smooth_softmax_ce(logits, label)
    jax.block_until_ready(out)

    ref = _reference(logits, label)
    assert jnp.allclose(out, ref, rtol=1e-5, atol=1e-5), (out, ref)

    # exercise the unreduced path too
    out_none = label_smooth_softmax_ce(logits, label, reduction="none")
    jax.block_until_ready(out_none)
    assert out_none.shape == (N, H, W)

    print("KERNEL_OK")
</pallas_src>

<mosaic_0001>
module attributes {stable_mosaic.version = 11 : i64} {
  func.func @_ls_ce_kernel(%arg0: i32, %arg1: i32, %arg2: memref<1x4x256xf32, #tpu.memory_space<vmem>>, %arg3: memref<1x1x256xi32, #tpu.memory_space<vmem>>, %arg4: memref<1x1x256xf32, #tpu.memory_space<vmem>>) attributes {dimension_semantics = [#tpu.dimension_semantics<parallel>, #tpu.dimension_semantics<parallel>], iteration_bounds = array<i64: 2, 1>, scalar_prefetch = 0 : i64, scratch_operands = 0 : i64, tpu.core_type = #tpu.core_type<tc>, window_params = [{transform_indices = @transform_0, window_bounds = array<i64: 1, 4, 256>}, {transform_indices = @transform_1, window_bounds = array<i64: 1, 1, 256>}, {transform_indices = @transform_2, window_bounds = array<i64: 1, 1, 256>}]} {
    %c0 = arith.constant 0 : index
    %c0_0 = arith.constant 0 : index
    %c0_1 = arith.constant 0 : index
    %0 = vector.load %arg2[%c0, %c0_0, %c0_1] : memref<1x4x256xf32, #tpu.memory_space<vmem>>, vector<1x4x256xf32>
    %1 = vector.shape_cast %0 : vector<1x4x256xf32> to vector<4x256xf32>
    %c0_2 = arith.constant 0 : index
    %c0_3 = arith.constant 0 : index
    %c0_4 = arith.constant 0 : index
    %2 = vector.load %arg3[%c0_2, %c0_3, %c0_4] : memref<1x1x256xi32, #tpu.memory_space<vmem>>, vector<1x1x256xi32>
    %3 = vector.shape_cast %2 : vector<1x1x256xi32> to vector<1x256xi32>
    %cst = arith.constant dense<0xFF800000> : vector<256xf32>
    %4 = vector.multi_reduction <maximumf>, %1, %cst [0] : vector<4x256xf32> to vector<256xf32>
    %5 = vector.shape_cast %4 : vector<256xf32> to vector<1x256xf32>
    %6 = vector.broadcast %5 : vector<1x256xf32> to vector<4x256xf32>
    %7 = arith.subf %1, %6 : vector<4x256xf32>
    %8 = math.exp %7 : vector<4x256xf32>
    %cst_5 = arith.constant dense<0.000000e+00> : vector<256xf32>
    %9 = vector.multi_reduction <add>, %8, %cst_5 [0] : vector<4x256xf32> to vector<256xf32>
    %10 = vector.shape_cast %9 : vector<256xf32> to vector<1x256xf32>
    %11 = math.log %10 : vector<1x256xf32>
    %cst_6 = arith.constant dense<0.000000e+00> : vector<256xf32>
    %12 = vector.multi_reduction <add>, %7, %cst_6 [0] : vector<4x256xf32> to vector<256xf32>
    %13 = vector.shape_cast %12 : vector<256xf32> to vector<1x256xf32>
    %c255_i32 = arith.constant 255 : i32
    %14 = vector.broadcast %c255_i32 : i32 to vector<1x256xi32>
    %15 = arith.cmpi eq, %3, %14 : vector<1x256xi32>
    %c0_i32 = arith.constant 0 : i32
    %16 = vector.broadcast %c0_i32 : i32 to vector<1x256xi32>
    %17 = arith.select %15, %16, %3 : vector<1x256xi1>, vector<1x256xi32>
    %18 = tpu.iota {dimensions = array<i32: 0>} : vector<4x256xi32>
    %19 = vector.broadcast %17 : vector<1x256xi32> to vector<4x256xi32>
    %20 = arith.cmpi eq, %18, %19 : vector<4x256xi32>
    %cst_7 = arith.constant 0.000000e+00 : f32
    %21 = vector.broadcast %cst_7 : f32 to vector<4x256xf32>
    %22 = arith.select %20, %7, %21 : vector<4x256xi1>, vector<4x256xf32>
    %cst_8 = arith.constant dense<0.000000e+00> : vector<256xf32>
    %23 = vector.multi_reduction <add>, %22, %cst_8 [0] : vector<4x256xf32> to vector<256xf32>
    %24 = vector.shape_cast %23 : vector<256xf32> to vector<1x256xf32>
    %cst_9 = arith.constant 4.000000e+00 : f32
    %25 = vector.broadcast %cst_9 : f32 to vector<1x256xf32>
    %26 = arith.mulf %25, %11 : vector<1x256xf32>
    %27 = arith.subf %13, %26 : vector<1x256xf32>
    %cst_10 = arith.constant 5.000000e-03 : f32
    %28 = vector.broadcast %cst_10 : f32 to vector<1x256xf32>
    %29 = arith.mulf %28, %27 : vector<1x256xf32>
    %30 = arith.subf %24, %11 : vector<1x256xf32>
    %cst_11 = arith.constant 0.89499998 : f32
    %31 = vector.broadcast %cst_11 : f32 to vector<1x256xf32>
    %32 = arith.mulf %31, %30 : vector<1x256xf32>
    %33 = arith.addf %29, %32 : vector<1x256xf32>
    %cst_12 = arith.constant 0.000000e+00 : f32
    %34 = vector.broadcast %cst_12 : f32 to vector<1x256xf32>
    %35 = arith.subf %34, %33 : vector<1x256xf32>
    %cst_13 = arith.constant 0.000000e+00 : f32
    %36 = vector.broadcast %cst_13 : f32 to vector<1x256xf32>
    %37 = arith.select %15, %36, %35 : vector<1x256xi1>, vector<1x256xf32>
    %c0_14 = arith.constant 0 : index
    %c0_15 = arith.constant 0 : index
    %c0_16 = arith.constant 0 : index
    %38 = vector.load %arg4[%c0_14, %c0_15, %c0_16] : memref<1x1x256xf32, #tpu.memory_space<vmem>>, vector<1x1x256xf32>
    %39 = vector.shape_cast %38 : vector<1x1x256xf32> to vector<1x256xf32>
    %40 = vector.shape_cast %37 : vector<1x256xf32> to vector<1x1x256xf32>
    tpu.vector_store %arg4[%c0_14, %c0_15, %c0_16], %40 {strides = array<i32>} : memref<1x1x256xf32, #tpu.memory_space<vmem>>, vector<1x1x256xf32>,
    return
  }
  func.func @transform_0(%arg0: i32, %arg1: i32) -> (i32, i32, i32) {
    %c0_i32 = arith.constant 0 : i32
    %c0_i32_0 = arith.constant 0 : i32
    return %arg0, %c0_i32, %arg1 : i32, i32, i32
  }
  func.func @transform_1(%arg0: i32, %arg1: i32) -> (i32, i32, i32) {
    %c0_i32 = arith.constant 0 : i32
    %c0_i32_0 = arith.constant 0 : i32
    return %arg0, %c0_i32, %arg1 : i32, i32, i32
  }
  func.func @transform_2(%arg0: i32, %arg1: i32) -> (i32, i32, i32) {
    %c0_i32 = arith.constant 0 : i32
    %c0_i32_0 = arith.constant 0 : i32
    return %arg0, %c0_i32, %arg1 : i32, i32, i32
  }
}

</mosaic_0001>

<llo_original>
// kernel: tpu_custom_call.1
$region0: #{tpu_custom_call.1}
  #allocation0 [shape = 'u32[]', space=smem, size = 0x4, offset = 0x4, fixed_abs, tag = 'smem constant byte address 0x4 - core index']
  #allocation1 [shape = 'u32[144,128]{1,0:T(1,128)}', space=vmem, size = 0x12000, scoped, tag = 'internal scratch']
  %s0 = inlined_call_operand.hbm [shape: f32[2,4,256], index: 0, kind: input, shape index: {}]
  %s1 = inlined_call_operand.hbm [shape: s32[2,1,256], index: 1, kind: input, shape index: {}]
  %s2 = inlined_call_operand.hbm [shape: f32[2,1,256], index: 2, kind: output, shape index: {}]
  %s3 = sld [smem:[#allocation0]]
  $region49: #{tpu_custom_call.1} parent=0
    _
  %s5 = ssub.s32 1, %s3
  %s6 = scalar_select 0, %s5, %s3
  $region1: #{tpu_custom_call.1} parent=0
    #allocation2 [shape = 'u8[8192]{0}', space=vmem, size = 0x2000, scoped, tag = 'input window, operand 0']
    #allocation3 [shape = 's32[2]{0}', space=sflag, size = 0x8, scoped, tag = 'scoped memory for tpu_custom_call.1']
    #allocation4 [shape = 's32[2]{0}', space=sflag, size = 0x8, scoped, tag = 'scoped memory for tpu_custom_call.1']
    #allocation5 [shape = 'u8[2048]{0}', space=vmem, size = 0x800, scoped, tag = 'input window, operand 1']
    #allocation6 [shape = 's32[2]{0}', space=sflag, size = 0x8, scoped, tag = 'scoped memory for tpu_custom_call.1']
    #allocation7 [shape = 'u8[2048]{0}', space=vmem, size = 0x800, scoped, tag = 'output window, operand 0']
    %7 = vsyncpa [#allocation3], 0
    %s8 = scalar_lea.sflag [#allocation3], 1
    %9 = vsyncpa %s8, 0
    %10 = vsyncpa [#allocation6], 0
    %s11 = scalar_lea.sflag [#allocation6], 1
    %12 = vsyncpa %s11, 0
    %13 = vsyncpa [#allocation4], 0
    %s14 = scalar_lea.sflag [#allocation4], 1
    %15 = vsyncpa %s14, 0
    loop: start=0, step=1, limit=4
    $region2: #{tpu_custom_call.1} parent=1 // loop_pre_header
      _
    $region3: #{tpu_custom_call.1} parent=1 // loop_header
      %s17 = sphi 0, %s21
      %p18 = scmp.ge.s32.totalorder %s17, 4
      %s24 = sphi 0, %s36
      %s25 = sphi 0, %s32
      %s26 = sphi 0, %s24
      %s27 = sphi 0, %s25
      %s28 = sphi 0, %s26
      %s29 = sphi 0, %s27
      %s41 = sphi 0, %s43
      %s44 = sphi 0, %s41
      %s45 = sphi 0, %s44
      %s61 = sphi 0, %s45
      %s69 = sphi 0, %s71
      %s72 = sphi 0, %s69
      %s73 = sphi 0, %s72
      %s89 = sphi 0, %s73
      %s97 = sphi 0, %s99
      %s100 = sphi 0, %s97
      %s101 = sphi 0, %s100
      %s117 = sphi 0, %s101
    $region4: #{tpu_custom_call.1} parent=1 // loop_header_branch
      %20 = sbr.rel (%p18) target = $region8
    $region5: #{tpu_custom_call.1} parent=1 // loop_body
      %s22 = ssub.s32 %s17, 1
      %s23 = ssub.s32 %s17, 2
      %s30 = sadd.s32 1, %s25
      %p31 = scmp.ge.s32.totalorder %s30, 1
      %s32 = scalar_select %p31, 0, %s30
      %s33 = sadd.s32 1, %s24
      %s34 = scalar_select %p31, %s33, %s24
      %p35 = scmp.ge.s32.totalorder %s34, 2
      %s36 = scalar_select %p35, 0, %s34
      %s37 = ssub.s32 %s24, %s36
      %s38 = ssub.s32 %s25, %s32
      %s39 = sor.u32 %s37, %s38
      %p40 = scmp.eq.s32.totalorder %s39, 0
      %s42 = sadd.s32 %s41, 1
      %s43 = scalar_select %p40, %s41, %s42
      %p46 = pneg %p40
      %p47 = scmp.eq.s32.totalorder %s17, 1
      %p48 = por %p46, %p47
      %p49 = scmp.ne.s32.totalorder %s41, %s44
      %p50 = scmp.eq.s32.totalorder %s17, 0
      %p51 = por %p49, %p50
      %p52 = scmp.ne.s32.totalorder %s41, %s44
      %p53 = scmp.eq.s32.totalorder %s22, 1
      %p54 = por %p52, %p53
      %p55 = scmp.ne.s32.totalorder %s44, %s45
      %p56 = scmp.eq.s32.totalorder %s22, 0
      %p57 = por %p55, %p56
      %p58 = scmp.ne.s32.totalorder %s44, %s45
      %p59 = scmp.eq.s32.totalorder %s23, 1
      %p60 = por %p58, %p59
      %p62 = scmp.ne.s32.totalorder %s45, %s61
      %p63 = scmp.eq.s32.totalorder %s23, 0
      %p64 = por %p62, %p63
      %s65 = ssub.s32 %s24, %s36
      %s66 = ssub.s32 %s25, %s32
      %s67 = sor.u32 %s65, %s66
      %p68 = scmp.eq.s32.totalorder %s67, 0
      %s70 = sadd.s32 %s69, 1
      %s71 = scalar_select %p68, %s69, %s70
      %p74 = pneg %p68
      %p75 = scmp.eq.s32.totalorder %s17, 1
      %p76 = por %p74, %p75
      %p77 = scmp.ne.s32.totalorder %s69, %s72
      %p78 = scmp.eq.s32.totalorder %s17, 0
      %p79 = por %p77, %p78
      %p80 = scmp.ne.s32.totalorder %s69, %s72
      %p81 = scmp.eq.s32.totalorder %s22, 1
      %p82 = por %p80, %p81
      %p83 = scmp.ne.s32.totalorder %s72, %s73
      %p84 = scmp.eq.s32.totalorder %s22, 0
      %p85 = por %p83, %p84
      %p86 = scmp.ne.s32.totalorder %s72, %s73
      %p87 = scmp.eq.s32.totalorder %s23, 1
      %p88 = por %p86, %p87
      %p90 = scmp.ne.s32.totalorder %s73, %s89
      %p91 = scmp.eq.s32.totalorder %s23, 0
      %p92 = por %p90, %p91
      %s93 = ssub.s32 %s24, %s36
      %s94 = ssub.s32 %s25, %s32
      %s95 = sor.u32 %s93, %s94
      %p96 = scmp.eq.s32.totalorder %s95, 0
      %s98 = sadd.s32 %s97, 1
      %s99 = scalar_select %p96, %s97, %s98
      %p102 = pneg %p96
      %p103 = scmp.eq.s32.totalorder %s17, 1
      %p104 = por %p102, %p103
      %p105 = scmp.ne.s32.totalorder %s97, %s100
      %p106 = scmp.eq.s32.totalorder %s17, 0
      %p107 = por %p105, %p106
      %p108 = scmp.ne.s32.totalorder %s97, %s100
      %p109 = scmp.eq.s32.totalorder %s22, 1
      %p110 = por %p108, %p109
      %p111 = scmp.ne.s32.totalorder %s100, %s101
      %p112 = scmp.eq.s32.totalorder %s22, 0
      %p113 = por %p111, %p112
      %p114 = scmp.ne.s32.totalorder %s100, %s101
      %p115 = scmp.eq.s32.totalorder %s23, 1
      %p116 = por %p114, %p115
      %p118 = scmp.ne.s32.totalorder %s101, %s117
      %p119 = scmp.eq.s32.totalorder %s23, 0
      %p120 = por %p118, %p119
      %p121 = scmp.le.s32.totalorder 1, %s17
      %p122 = scmp.lt.s32.totalorder %s17, 3
      %p123 = pnand %p121, %p122
      %p124 = pneg %p123
      // Predicated region
      $region9: #{tpu_custom_call.1} parent=5 // pred_check
        _
      $region10: #{tpu_custom_call.1} parent=5 // pred_check_branch
        %126 = sbr.rel (%p123) target = $region12
      $region11: #{tpu_custom_call.1} parent=5 // pred_region
        %s127 = ssub.s32 %s17, 1
      $region12: #{tpu_custom_call.1} parent=5 // pred_fallthru
        _
      %p128 = scmp.lt.s32.totalorder %s17, 2
      // Predicated region
      $region13: #{tpu_custom_call.1} parent=5 // pred_check
        %p129 = pneg %p128
      $region14: #{tpu_custom_call.1} parent=5 // pred_check_branch
        %131 = sbr.rel (%p129) target = $region16
      $region15: #{tpu_custom_call.1} parent=5 // pred_region
        // Predicated region
        $region17: #{tpu_custom_call.1} parent=15 // pred_check
          %p132 = pneg %p51
        $region18: #{tpu_custom_call.1} parent=15 // pred_check_branch
          %134 = sbr.rel (%p132) target = $region20
        $region19: #{tpu_custom_call.1} parent=15 // pred_region
          %s135 = sand.u32 %s41, 1
          %s136 = scalar_lea.sflag [#allocation3], %s135
          %s137 = sand.u32 %s41, 1
          %s138 = smul.addr %s137, 8
          %s139 = scalar_lea.vmem [#allocation2], %s138
          %s140 = smul.u32 2, %s25
          %s142 = ssub.s32 128, 128
          %143 = vsyncadd %s136, %s142
          %s144 = smul.addr %s24, 2
          %s145 = sadd.s32 %s140, %s144
          %s146 = smul.addr %s145, 64
          %s147 = scalar_lea.hbm %s0, %s146
          %s149 = sshll.u32 %s139, 4
          %s150 = int_to_ptr.vmem [resolvable:$true] %s149
          %152 = dma.hbm_to_vmem [thread:$0]  %s147, 128, %s150, %s136
        $region20: #{tpu_custom_call.1} parent=15 // pred_fallthru
          _
        // Predicated region
        $region21: #{tpu_custom_call.1} parent=15 // pred_check
          %p153 = pneg %p79
        $region22: #{tpu_custom_call.1} parent=15 // pred_check_branch
          %155 = sbr.rel (%p153) target = $region24
        $region23: #{tpu_custom_call.1} parent=15 // pred_region
          %s156 = sand.u32 %s69, 1
          %s157 = scalar_lea.sflag [#allocation6], %s156
          %s158 = sand.u32 %s69, 1
          %s159 = smul.addr %s158, 2
          %s160 = scalar_lea.vmem [#allocation5], %s159
          %s161 = smul.u32 2, %s25
          %s163 = ssub.s32 32, 32
          %164 = vsyncadd %s157, %s163
          %s165 = smul.addr %s24, 2
          %s166 = sadd.s32 %s161, %s165
          %s167 = smul.addr %s166, 16
          %s168 = scalar_lea.hbm %s1, %s167
          %s170 = sshll.u32 %s160, 4
          %s171 = int_to_ptr.vmem [resolvable:$true] %s170
          %173 = dma.hbm_to_vmem [thread:$0]  %s168, 32, %s171, %s157
        $region24: #{tpu_custom_call.1} parent=15 // pred_fallthru
          _
      $region16: #{tpu_custom_call.1} parent=5 // pred_fallthru
        _
      %p174 = scmp.le.s32.totalorder 1, %s17
      %p175 = scmp.lt.s32.totalorder %s17, 3
      %p176 = pnand %p174, %p175
      %p177 = pneg %p176
      // Predicated region
      $region25: #{tpu_custom_call.1} parent=5 // pred_check
        _
      $region26: #{tpu_custom_call.1} parent=5 // pred_check_branch
        %179 = sbr.rel (%p176) target = $region28
      $region27: #{tpu_custom_call.1} parent=5 // pred_region
        %s180 = ssub.s32 %s17, 1
        %s181 = sand.u32 %s44, 1
        %s182 = scalar_lea.sflag [#allocation3], %s181
        %s183 = sand.u32 %s44, 1
        %s184 = smul.addr %s183, 8
        %s185 = scalar_lea.vmem [#allocation2], %s184
        // Predicated region
        $region29: #{tpu_custom_call.1} parent=27 // pred_check
          %p186 = pneg %p57
        $region30: #{tpu_custom_call.1} parent=27 // pred_check_branch
          %188 = sbr.rel (%p186) target = $region32
        $region31: #{tpu_custom_call.1} parent=27 // pred_region
          %189 = dma.done %s182, 128
        $region32: #{tpu_custom_call.1} parent=27 // pred_fallthru
          _
        %s190 = sand.u32 %s72, 1
        %s191 = scalar_lea.sflag [#allocation6], %s190
        %s192 = sand.u32 %s72, 1
        %s193 = smul.addr %s192, 2
        %s194 = scalar_lea.vmem [#allocation5], %s193
        // Predicated region
        $region33: #{tpu_custom_call.1} parent=27 // pred_check
          %p195 = pneg %p85
        $region34: #{tpu_custom_call.1} parent=27 // pred_check_branch
          %197 = sbr.rel (%p195) target = $region36
        $region35: #{tpu_custom_call.1} parent=27 // pred_region
          %198 = dma.done %s191, 32
        $region36: #{tpu_custom_call.1} parent=27 // pred_fallthru
          _
        %s199 = sand.u32 %s44, 1
        %s200 = scalar_lea.sflag [#allocation3], %s199
        %s201 = sand.u32 %s44, 1
        %s202 = smul.addr %s201, 8
        %s203 = scalar_lea.vmem [#allocation2], %s202
        %p204 = pneg %p57
        %p205 = pneg %p54
        %s206 = sand.u32 %s72, 1
        %s207 = scalar_lea.sflag [#allocation6], %s206
        %s208 = sand.u32 %s72, 1
        %s209 = smul.addr %s208, 2
        %s210 = scalar_lea.vmem [#allocation5], %s209
        %p211 = pneg %p85
        %p212 = pneg %p82
        %p213 = pneg %p113
        %p214 = pneg %p110
        %s215 = sand.u32 %s100, 1
        %s216 = scalar_lea.sflag [#allocation4], %s215
        %s217 = sand.u32 %s100, 1
        %s218 = smul.addr %s217, 2
        %s219 = scalar_lea.vmem [#allocation7], %s218
        %s220 = smul.u32 2, %s27
        %s221 = smul.u32 2, %s27
        %s222 = smul.u32 2, %s27
        %v223 = vld [vmem:[%s185] sm:$0xff]
        %v224 = vld [vmem:[%s194] sm:$0x3]
        %v226 = vcombine.high %v223, %v223
        %vm228 = vcmask 1043456
        %v229 = vsel %vm228, %v223, -inf
        %v230 = vrot.slane %v229, 4
        %v231 = vmax.f32 %v229, %v230
        %v232 = vrot.slane %v231, 2
        %v233 = vmax.f32 %v231, %v232
        %v234 = vrot.slane %v233, 1
        %v235 = vmax.f32 %v233, %v234
        %v236 = vsel %vm228, %v226, -inf
        %v237 = vrot.slane %v236, 4
        %v238 = vmax.f32 %v236, %v237
        %v239 = vrot.slane %v238, 2
        %v240 = vmax.f32 %v238, %v239
        %v241 = vrot.slane %v240, 1
        %v242 = vmax.f32 %v240, %v241
        %v245 = vcombine.low %v235, %v242
        %v247 = vsub.f32 %v223, %v245
        %v248 = vmul.f32 %v247, 1.442695
        %v249 = vpow.pop %v248
        %v251 = vcombine.high %v249, %v249
        %v253 = vsel %vm228, %v249, 0.0
        %v254 = vrot.slane %v253, 4
        %v255 = vadd.f32 %v253, %v254
        %v256 = vrot.slane %v255, 2
        %v257 = vadd.f32 %v255, %v256
        %v258 = vrot.slane %v257, 1
        %v259 = vadd.f32 %v257, %v258
        %v260 = vsel %vm228, %v251, 0.0
        %v261 = vrot.slane %v260, 4
        %v262 = vadd.f32 %v260, %v261
        %v263 = vrot.slane %v262, 2
        %v264 = vadd.f32 %v262, %v263
        %v265 = vrot.slane %v264, 1
        %v266 = vadd.f32 %v264, %v265
        %v267 = vlog2.pop %v259
        %v268 = vmul.f32 %v267, 0.6931472
        %v269 = vlog2.pop %v266
        %v270 = vmul.f32 %v269, 0.6931472
        %v272 = vcombine.high %v247, %v247
        %v274 = vsel %vm228, %v247, 0.0
        %v275 = vrot.slane %v274, 4
        %v276 = vadd.f32 %v274, %v275
        %v277 = vrot.slane %v276, 2
        %v278 = vadd.f32 %v276, %v277
        %v279 = vrot.slane %v278, 1
        %v280 = vadd.f32 %v278, %v279
        %v281 = vsel %vm228, %v272, 0.0
        %v282 = vrot.slane %v281, 4
        %v283 = vadd.f32 %v281, %v282
        %v284 = vrot.slane %v283, 2
        %v285 = vadd.f32 %v283, %v284
        %v286 = vrot.slane %v285, 1
        %v287 = vadd.f32 %v285, %v286
        %vm288 = vcmp.eq.s32.totalorder %v224, 255
        %v289 = vsel %vm288, 0, %v224
        %v290 = vlaneseq
        %v291 = vshrl.u32 %v290, 7
        %v292 = vlaneseq
        %v293 = vshrl.u32 %v292, 7
        %v294 = vsub.s32 0, %v293
        %v295 = vrot.slane %v289, %v294
        %v296 = vlaneseq
        %v297 = vshrl.u32 %v296, 7
        %v298 = vsub.s32 1, %v297
        %v299 = vrot.slane %v289, %v298
        %vm300 = vcmp.eq.s32.totalorder %v291, %v295
        %vm301 = vcmp.eq.s32.totalorder %v291, %v299
        %v302 = vsel %vm300, %v247, 0.0
        %v303 = vsel %vm301, %v272, 0.0
        %v304 = vsel %vm228, %v302, 0.0
        %v305 = vrot.slane %v304, 4
        %v306 = vadd.f32 %v304, %v305
        %v307 = vrot.slane %v306, 2
        %v308 = vadd.f32 %v306, %v307
        %v309 = vrot.slane %v308, 1
        %v310 = vadd.f32 %v308, %v309
        %v311 = vsel %vm228, %v303, 0.0
        %v312 = vrot.slane %v311, 4
        %v313 = vadd.f32 %v311, %v312
        %v314 = vrot.slane %v313, 2
        %v315 = vadd.f32 %v313, %v314
        %v316 = vrot.slane %v315, 1
        %v317 = vadd.f32 %v315, %v316
        %v318 = vmul.f32 %v268, 4.0
        %v319 = vmul.f32 %v270, 4.0
        %v320 = vsub.f32 %v280, %v318
        %v321 = vsub.f32 %v287, %v319
        %v322 = vmul.f32 %v320, 0.005
        %v323 = vmul.f32 %v321, 0.005
        %v324 = vsub.f32 %v310, %v268
        %v325 = vsub.f32 %v317, %v270
        %v326 = vmul.f32 %v324, 0.895
        %v327 = vmul.f32 %v325, 0.895
        %v328 = vadd.f32 %v322, %v326
        %v329 = vadd.f32 %v323, %v327
        %v330 = vsub.f32 0.0, %v328
        %v331 = vsub.f32 0.0, %v329
        %v334 = vcombine.low %v330, %v331
        %v336 = vunpack.c.l.s4 1966171168
        %v337 = vunpack.c.0.s8 %v336
        %v338 = vlaneseq
        %v339 = vshrl.u32 %v338, 7
        %v340 = vsub.s32 %v337, %v339
        %v341 = vrot.slane %v334, %v340
        %v343 = vunpack.c.l.s4 1966171168
        %v344 = vunpack.c.0.s8 %v343
        %v345 = vlaneseq
        %v346 = vshrl.u32 %v345, 7
        %v347 = vsub.s32 %v344, %v346
        %v348 = vrot.slane %v341, %v347
        %v350 = vsel %vm288, 0.0, %v348
        %v351 = vlaneseq
        %vm352 = vcmp.ge.s32.totalorder %v351, 0
        %vm353 = vcmp.lt.s32.totalorder %v351, 256
        %vm354 = vmand %vm352, %vm353
        %355 = vst.msk [vmem:[%s219] sm:$0x3] %vm354, %v350
        %s356 = sand.u32 %s100, 1
        %s357 = scalar_lea.sflag [#allocation4], %s356
        %s358 = sand.u32 %s100, 1
        %s359 = smul.addr %s358, 2
        %s360 = scalar_lea.vmem [#allocation7], %s359
        // Predicated region
        $region37: #{tpu_custom_call.1} parent=27 // pred_check
          %p361 = pneg %p110
        $region38: #{tpu_custom_call.1} parent=27 // pred_check_branch
          %363 = sbr.rel (%p361) target = $region40
        $region39: #{tpu_custom_call.1} parent=27 // pred_region
          %s364 = smul.u32 2, %s27
          %s366 = ssub.s32 32, 32
          %367 = vsyncadd %s357, %s366
          %s368 = smul.addr %s26, 2
          %s369 = sadd.s32 %s364, %s368
          %s370 = smul.addr %s369, 16
          %s371 = scalar_lea.hbm %s2, %s370
          %s373 = sshll.u32 %s360, 4
          %s374 = int_to_ptr.vmem [resolvable:$true] %s373
          %376 = dma.vmem_to_hbm [thread:$0]  %s374, 32, %s371, %s357
        $region40: #{tpu_custom_call.1} parent=27 // pred_fallthru
          _
      $region28: #{tpu_custom_call.1} parent=5 // pred_fallthru
        _
      %p377 = scmp.le.s32.totalorder 2, %s17
      // Predicated region
      $region41: #{tpu_custom_call.1} parent=5 // pred_check
        %p378 = pneg %p377
      $region42: #{tpu_custom_call.1} parent=5 // pred_check_branch
        %380 = sbr.rel (%p378) target = $region44
      $region43: #{tpu_custom_call.1} parent=5 // pred_region
        %s381 = ssub.s32 %s17, 2
        // Predicated region
        $region45: #{tpu_custom_call.1} parent=43 // pred_check
          %p382 = pneg %p116
        $region46: #{tpu_custom_call.1} parent=43 // pred_check_branch
          %384 = sbr.rel (%p382) target = $region48
        $region47: #{tpu_custom_call.1} parent=43 // pred_region
          %s385 = sand.u32 %s101, 1
          %s386 = scalar_lea.sflag [#allocation4], %s385
          %s387 = sand.u32 %s101, 1
          %s388 = smul.addr %s387, 2
          %s389 = scalar_lea.vmem [#allocation7], %s388
          %390 = dma.done %s386, 32
        $region48: #{tpu_custom_call.1} parent=43 // pred_fallthru
          _
      $region44: #{tpu_custom_call.1} parent=5 // pred_fallthru
        _
    $region6: #{tpu_custom_call.1} parent=1 // loop_footer
      %s21 = sadd.s32 1, %s17
    $region7: #{tpu_custom_call.1} parent=1 // loop_footer_branch
      %16 = sbr.rel target = $region3
    $region8: #{tpu_custom_call.1} parent=1 // loop_exit
      _
    %391 = vsyncpa [#allocation3], 1
    %s392 = scalar_lea.sflag [#allocation3], 1
    %393 = vsyncpa %s392, 1
    %394 = vsyncpa [#allocation6], 1
    %s395 = scalar_lea.sflag [#allocation6], 1
    %396 = vsyncpa %s395, 1
    %397 = vsyncpa [#allocation4], 1
    %s398 = scalar_lea.sflag [#allocation4], 1
    %399 = vsyncpa %s398, 1

</llo_original>
